<compile_context>
chip_gen: v5e
topology: v5e:2x2
jax: 0.10.0
libtpu: 0.0.40
codegen_flags: <defaults>
</compile_context>

<pallas_src>
import functools

import jax
import jax.numpy as jnp
from jax.experimental import pallas as pl
from jax.experimental.pallas import tpu as pltpu


def _round_up(n, m):
    return ((n + m - 1) // m) * m


def _default_block_b(B):
    """Pick a large batch tile (multiple of 8 for f32 sublane tiling).

    - Cap at 512 rows (VMEM footprint stays tiny for these feature widths).
    - If the batch is big enough, keep >=2 grid steps so both v7x TensorCores
      are used via the "parallel" grid axis.
    """
    Bp = _round_up(max(B, 8), 8)
    if Bp <= 16:
        return Bp
    if Bp <= 1024:
        # split into (at least) two tiles for megacore sharding on v7x
        return _round_up(pl.cdiv(Bp, 2), 8)
    return 512


def encoder_kernel(x_ref, w1_ref, b1_ref, w2_ref, b2_ref, w3_ref, b3_ref,
                   out_ref):
    x = x_ref[...]

    # fc1 + relu  (MXU matmul, f32 accumulation)
    h = jnp.dot(x, w1_ref[...], preferred_element_type=jnp.float32) + b1_ref[...]
    h = jnp.maximum(h, 0.0)

    # fc2 + relu
    h = jnp.dot(h, w2_ref[...], preferred_element_type=jnp.float32) + b2_ref[...]
    h = jnp.maximum(h, 0.0)

    # fused heads: [mu | sigma] = h @ [W31|W32] + [b31|b32]  -> single lane-dense store
    out_ref[...] = (jnp.dot(h, w3_ref[...], preferred_element_type=jnp.float32)
                    + b3_ref[...]).astype(out_ref.dtype)


@functools.partial(jax.jit, static_argnames=("block_b",))
def encoder_forward(x, params, block_b=None):
    """x: (B, input_dim) f32. params: dict of (in,out) weights and (1,out) biases.

    Returns (mu, sigma), each (B, latent_dim).
    """
    B, input_dim = x.shape
    hidden_dim = params["w1"].shape[1]
    latent_dim = params["w31"].shape[1]

    if block_b is None:
        block_b = _default_block_b(B)

    # Pad batch so any B works with the chosen (large) tile; trimmed afterwards.
    B_pad = _round_up(B, block_b)
    if B_pad != B:
        x = jnp.pad(x, ((0, B_pad - B), (0, 0)))

    grid = (B_pad // block_b,)

    # Fuse the two heads into one matmul / one output slab (lane-dense store,
    # halves MXU pushes and vst pressure for the head — matters most on v5e).
    w3 = jnp.concatenate([params["w31"], params["w32"]], axis=1)   # (hidden, 2*latent)
    b3 = jnp.concatenate([params["b31"], params["b32"]], axis=1)   # (1, 2*latent)

    # Optional: cast x / weights to bf16 here (keep f32 accumulation) for
    # MXU-native throughput at larger hidden dims; kept f32 for exactness.

    x_spec = pl.BlockSpec((block_b, input_dim), lambda i: (i, 0))

    def full_spec(shape):
        # Constant index_map -> weights/biases stay resident across grid steps.
        return pl.BlockSpec(shape, lambda i: (0, 0))

    out = pl.pallas_call(
        encoder_kernel,
        out_shape=jax.ShapeDtypeStruct((B_pad, 2 * latent_dim), x.dtype),
        grid_spec=pltpu.PrefetchScalarGridSpec(
            num_scalar_prefetch=0,
            grid=grid,
            in_specs=[
                x_spec,
                full_spec(params["w1"].shape), full_spec(params["b1"].shape),
                full_spec(params["w2"].shape), full_spec(params["b2"].shape),
                full_spec(w3.shape), full_spec(b3.shape),
            ],
            out_specs=pl.BlockSpec((block_b, 2 * latent_dim), lambda i: (i, 0)),
        ),
        compiler_params=pltpu.CompilerParams(
            dimension_semantics=("parallel",),
            # Explicit (modest) limit; re-budget if hidden_dim / block_b are
            # scaled up, especially on v7x (64 MiB physical VMEM).
            vmem_limit_bytes=32 * 1024 * 1024,
        ),
    )(x, params["w1"], params["b1"], params["w2"], params["b2"], w3, b3)

    out = out[:B]
    mu = out[:, :latent_dim]
    sigma = out[:, latent_dim:]
    return mu, sigma


def init_params(key, input_dim, hidden_dim, latent_dim):
    """Deterministic synthetic init (same shapes as the torch module)."""
    ks = jax.random.split(key, 8)

    def linear(kw, kb, fan_in, fan_out):
        bound = 1.0 / jnp.sqrt(fan_in)
        # Stored as (in, out): transposed relative to torch's (out, in).
        w = jax.random.uniform(kw, (fan_in, fan_out), jnp.float32, -bound, bound)
        b = jax.random.uniform(kb, (1, fan_out), jnp.float32, -bound, bound)
        return w, b

    w1, b1 = linear(ks[0], ks[1], input_dim, hidden_dim)
    w2, b2 = linear(ks[2], ks[3], hidden_dim, hidden_dim)
    w31, b31 = linear(ks[4], ks[5], hidden_dim, latent_dim)
    w32, b32 = linear(ks[6], ks[7], hidden_dim, latent_dim)
    return dict(w1=w1, b1=b1, w2=w2, b2=b2,
                w31=w31, b31=b31, w32=w32, b32=b32)


def encoder_ref(x, p):  # pure-JAX reference for correctness checking
    h = jax.nn.relu(x @ p["w1"] + p["b1"])
    h = jax.nn.relu(h @ p["w2"] + p["b2"])
    mu = h @ p["w31"] + p["b31"]
    sigma = h @ p["w32"] + p["b32"]
    return mu, sigma


if __name__ == "__main__":
    input_dim, hidden_dim, latent_dim = 32, 32, 16

    key = jax.random.PRNGKey(0)
    k_x, k_p, k_x2 = jax.random.split(key, 3)
    params = init_params(k_p, input_dim, hidden_dim, latent_dim)

    # Case 1: batch divisible by the chosen tile (block_b=8 -> grid of 2 steps,
    # exercising the "parallel" axis that shards across v7x's two TensorCores).
    batch = 16
    x = jax.random.normal(k_x, (batch, input_dim), jnp.float32)
    mu, sigma = encoder_forward(x, params)
    jax.block_until_ready((mu, sigma))
    mu_ref, sigma_ref = encoder_ref(x, params)
    assert mu.shape == (batch, latent_dim) and sigma.shape == (batch, latent_dim)
    assert jnp.allclose(mu, mu_ref, atol=1e-5, rtol=1e-5)
    assert jnp.allclose(sigma, sigma_ref, atol=1e-5, rtol=1e-5)

    # Case 2: ragged batch (exercises the padding path instead of a hard assert).
    batch2 = 13
    x2 = jax.random.normal(k_x2, (batch2, input_dim), jnp.float32)
    mu2, sigma2 = encoder_forward(x2, params)
    jax.block_until_ready((mu2, sigma2))
    mu2_ref, sigma2_ref = encoder_ref(x2, params)
    assert mu2.shape == (batch2, latent_dim) and sigma2.shape == (batch2, latent_dim)
    assert jnp.allclose(mu2, mu2_ref, atol=1e-5, rtol=1e-5)
    assert jnp.allclose(sigma2, sigma2_ref, atol=1e-5, rtol=1e-5)

    print("KERNEL_OK")
</pallas_src>

<mosaic_0001>
module attributes {stable_mosaic.version = 11 : i64} {
  func.func @encoder_kernel(%arg0: i32, %arg1: memref<16x32xf32, #tpu.memory_space<vmem>>, %arg2: memref<32x32xf32, #tpu.memory_space<vmem>>, %arg3: memref<1x32xf32, #tpu.memory_space<vmem>>, %arg4: memref<32x32xf32, #tpu.memory_space<vmem>>, %arg5: memref<1x32xf32, #tpu.memory_space<vmem>>, %arg6: memref<32x32xf32, #tpu.memory_space<vmem>>, %arg7: memref<1x32xf32, #tpu.memory_space<vmem>>, %arg8: memref<16x32xf32, #tpu.memory_space<vmem>>) attributes {dimension_semantics = [#tpu.dimension_semantics<parallel>], iteration_bounds = array<i64: 1>, scalar_prefetch = 0 : i64, scratch_operands = 0 : i64, tpu.core_type = #tpu.core_type<tc>, window_params = [{transform_indices = @transform_0, window_bounds = array<i64: 16, 32>}, {pipeline_mode = #tpu.pipeline_mode<synchronous>, transform_indices = @transform_1, window_bounds = array<i64: 32, 32>}, {pipeline_mode = #tpu.pipeline_mode<synchronous>, transform_indices = @transform_2, window_bounds = array<i64: 1, 32>}, {pipeline_mode = #tpu.pipeline_mode<synchronous>, transform_indices = @transform_3, window_bounds = array<i64: 32, 32>}, {pipeline_mode = #tpu.pipeline_mode<synchronous>, transform_indices = @transform_4, window_bounds = array<i64: 1, 32>}, {pipeline_mode = #tpu.pipeline_mode<synchronous>, transform_indices = @transform_5, window_bounds = array<i64: 32, 32>}, {pipeline_mode = #tpu.pipeline_mode<synchronous>, transform_indices = @transform_6, window_bounds = array<i64: 1, 32>}, {transform_indices = @transform_7, window_bounds = array<i64: 16, 32>}]} {
    %c0 = arith.constant 0 : index
    %c0_0 = arith.constant 0 : index
    %0 = vector.load %arg1[%c0, %c0_0] : memref<16x32xf32, #tpu.memory_space<vmem>>, vector<16x32xf32>
    %c0_1 = arith.constant 0 : index
    %c0_2 = arith.constant 0 : index
    %1 = vector.load %arg2[%c0_1, %c0_2] : memref<32x32xf32, #tpu.memory_space<vmem>>, vector<32x32xf32>
    %cst = arith.constant dense<0.000000e+00> : vector<16x32xf32>
    %2 = tpu.matmul %0, %1, %cst {dimension_numbers = #tpu.dot_dimension_numbers<[1], [0], [0], [1], [0, 0, 1, 1], [], []>} : vector<16x32xf32>, vector<32x32xf32>, vector<16x32xf32> -> vector<16x32xf32>
    %c0_3 = arith.constant 0 : index
    %c0_4 = arith.constant 0 : index
    %3 = vector.load %arg3[%c0_3, %c0_4] : memref<1x32xf32, #tpu.memory_space<vmem>>, vector<1x32xf32>
    %4 = vector.broadcast %3 : vector<1x32xf32> to vector<16x32xf32>
    %5 = arith.addf %2, %4 : vector<16x32xf32>
    %cst_5 = arith.constant 0.000000e+00 : f32
    %6 = vector.broadcast %cst_5 : f32 to vector<16x32xf32>
    %7 = arith.maximumf %5, %6 : vector<16x32xf32>
    %c0_6 = arith.constant 0 : index
    %c0_7 = arith.constant 0 : index
    %8 = vector.load %arg4[%c0_6, %c0_7] : memref<32x32xf32, #tpu.memory_space<vmem>>, vector<32x32xf32>
    %cst_8 = arith.constant dense<0.000000e+00> : vector<16x32xf32>
    %9 = tpu.matmul %7, %8, %cst_8 {dimension_numbers = #tpu.dot_dimension_numbers<[1], [0], [0], [1], [0, 0, 1, 1], [], []>} : vector<16x32xf32>, vector<32x32xf32>, vector<16x32xf32> -> vector<16x32xf32>
    %c0_9 = arith.constant 0 : index
    %c0_10 = arith.constant 0 : index
    %10 = vector.load %arg5[%c0_9, %c0_10] : memref<1x32xf32, #tpu.memory_space<vmem>>, vector<1x32xf32>
    %11 = vector.broadcast %10 : vector<1x32xf32> to vector<16x32xf32>
    %12 = arith.addf %9, %11 : vector<16x32xf32>
    %cst_11 = arith.constant 0.000000e+00 : f32
    %13 = vector.broadcast %cst_11 : f32 to vector<16x32xf32>
    %14 = arith.maximumf %12, %13 : vector<16x32xf32>
    %c0_12 = arith.constant 0 : index
    %c0_13 = arith.constant 0 : index
    %15 = vector.load %arg6[%c0_12, %c0_13] : memref<32x32xf32, #tpu.memory_space<vmem>>, vector<32x32xf32>
    %cst_14 = arith.constant dense<0.000000e+00> : vector<16x32xf32>
    %16 = tpu.matmul %14, %15, %cst_14 {dimension_numbers = #tpu.dot_dimension_numbers<[1], [0], [0], [1], [0, 0, 1, 1], [], []>} : vector<16x32xf32>, vector<32x32xf32>, vector<16x32xf32> -> vector<16x32xf32>
    %c0_15 = arith.constant 0 : index
    %c0_16 = arith.constant 0 : index
    %17 = vector.load %arg7[%c0_15, %c0_16] : memref<1x32xf32, #tpu.memory_space<vmem>>, vector<1x32xf32>
    %18 = vector.broadcast %17 : vector<1x32xf32> to vector<16x32xf32>
    %19 = arith.addf %16, %18 : vector<16x32xf32>
    %c0_17 = arith.constant 0 : index
    %c0_18 = arith.constant 0 : index
    %20 = vector.load %arg8[%c0_17, %c0_18] : memref<16x32xf32, #tpu.memory_space<vmem>>, vector<16x32xf32>
    tpu.vector_store %arg8[%c0_17, %c0_18], %19 {strides = array<i32>} : memref<16x32xf32, #tpu.memory_space<vmem>>, vector<16x32xf32>,
    return
  }
  func.func @transform_0(%arg0: i32) -> (i32, i32) {
    %c0_i32 = arith.constant 0 : i32
    %c0_i32_0 = arith.constant 0 : i32
    return %arg0, %c0_i32 : i32, i32
  }
  func.func @transform_1(%arg0: i32) -> (i32, i32) {
    %c0_i32 = arith.constant 0 : i32
    %c0_i32_0 = arith.constant 0 : i32
    %c0_i32_1 = arith.constant 0 : i32
    return %c0_i32, %c0_i32_0 : i32, i32
  }
  func.func @transform_2(%arg0: i32) -> (i32, i32) {
    %c0_i32 = arith.constant 0 : i32
    %c0_i32_0 = arith.constant 0 : i32
    %c0_i32_1 = arith.constant 0 : i32
    return %c0_i32, %c0_i32_0 : i32, i32
  }
  func.func @transform_3(%arg0: i32) -> (i32, i32) {
    %c0_i32 = arith.constant 0 : i32
    %c0_i32_0 = arith.constant 0 : i32
    %c0_i32_1 = arith.constant 0 : i32
    return %c0_i32, %c0_i32_0 : i32, i32
  }
  func.func @transform_4(%arg0: i32) -> (i32, i32) {
    %c0_i32 = arith.constant 0 : i32
    %c0_i32_0 = arith.constant 0 : i32
    %c0_i32_1 = arith.constant 0 : i32
    return %c0_i32, %c0_i32_0 : i32, i32
  }
  func.func @transform_5(%arg0: i32) -> (i32, i32) {
    %c0_i32 = arith.constant 0 : i32
    %c0_i32_0 = arith.constant 0 : i32
    %c0_i32_1 = arith.constant 0 : i32
    return %c0_i32, %c0_i32_0 : i32, i32
  }
  func.func @transform_6(%arg0: i32) -> (i32, i32) {
    %c0_i32 = arith.constant 0 : i32
    %c0_i32_0 = arith.constant 0 : i32
    %c0_i32_1 = arith.constant 0 : i32
    return %c0_i32, %c0_i32_0 : i32, i32
  }
  func.func @transform_7(%arg0: i32) -> (i32, i32) {
    %c0_i32 = arith.constant 0 : i32
    %c0_i32_0 = arith.constant 0 : i32
    return %arg0, %c0_i32 : i32, i32
  }
}

</mosaic_0001>

<llo_original>
// kernel: encoder_forward.1
$region0: #{encoder_forward.1}
  #allocation0 [shape = 'u32[]', space=smem, size = 0x4, offset = 0x4, fixed_abs, tag = 'smem constant byte address 0x4 - core index']
  #allocation1 [shape = 'u32[72,128]{1,0:T(1,128)}', space=vmem, size = 0x9000, scoped, tag = 'internal scratch']
  %s0 = inlined_call_operand.vmem [shape: f32[16,32], index: 0, kind: input, shape index: {}]
  %s1 = inlined_call_operand.vmem [shape: f32[32,32], index: 1, kind: input, shape index: {}]
  %s2 = inlined_call_operand.vmem [shape: f32[1,32], index: 2, kind: input, shape index: {}]
  %s3 = inlined_call_operand.vmem [shape: f32[32,32], index: 3, kind: input, shape index: {}]
  %s4 = inlined_call_operand.vmem [shape: f32[1,32], index: 4, kind: input, shape index: {}]
  %s5 = inlined_call_operand.vmem [shape: f32[32,32], index: 5, kind: input, shape index: {}]
  %s6 = inlined_call_operand.vmem [shape: f32[1,32], index: 6, kind: input, shape index: {}]
  %s7 = inlined_call_operand.vmem [shape: f32[16,32], index: 7, kind: output, shape index: {}]
  %s8 = sld [smem:[#allocation0]]
  $region38: #{encoder_forward.1} parent=0
    _
  %s10 = ssub.s32 1, %s8
  %s11 = scalar_select 0, %s10, %s8
  // Predicated region
  $region2: #{encoder_forward.1} parent=0 // pred_check
    _
  $region3: #{encoder_forward.1} parent=0 // pred_check_branch
    %13 = sbr.rel (0) target = $region5
  $region4: #{encoder_forward.1} parent=0 // pred_region
    _
  $region5: #{encoder_forward.1} parent=0 // pred_fallthru
    _
  // Predicated region
  $region6: #{encoder_forward.1} parent=0 // pred_check
    _
  $region7: #{encoder_forward.1} parent=0 // pred_check_branch
    %15 = sbr.rel (0) target = $region9
  $region8: #{encoder_forward.1} parent=0 // pred_region
    _
  $region9: #{encoder_forward.1} parent=0 // pred_fallthru
    _
  // Predicated region
  $region10: #{encoder_forward.1} parent=0 // pred_check
    _
  $region11: #{encoder_forward.1} parent=0 // pred_check_branch
    %17 = sbr.rel (0) target = $region13
  $region12: #{encoder_forward.1} parent=0 // pred_region
    _
  $region13: #{encoder_forward.1} parent=0 // pred_fallthru
    _
  // Predicated region
  $region14: #{encoder_forward.1} parent=0 // pred_check
    _
  $region15: #{encoder_forward.1} parent=0 // pred_check_branch
    %19 = sbr.rel (0) target = $region17
  $region16: #{encoder_forward.1} parent=0 // pred_region
    _
  $region17: #{encoder_forward.1} parent=0 // pred_fallthru
    _
  // Predicated region
  $region18: #{encoder_forward.1} parent=0 // pred_check
    _
  $region19: #{encoder_forward.1} parent=0 // pred_check_branch
    %21 = sbr.rel (0) target = $region21
  $region20: #{encoder_forward.1} parent=0 // pred_region
    _
  $region21: #{encoder_forward.1} parent=0 // pred_fallthru
    _
  // Predicated region
  $region22: #{encoder_forward.1} parent=0 // pred_check
    _
  $region23: #{encoder_forward.1} parent=0 // pred_check_branch
    %23 = sbr.rel (0) target = $region25
  $region24: #{encoder_forward.1} parent=0 // pred_region
    _
  $region25: #{encoder_forward.1} parent=0 // pred_fallthru
    _
  // Predicated region
  $region26: #{encoder_forward.1} parent=0 // pred_check
    _
  $region27: #{encoder_forward.1} parent=0 // pred_check_branch
    %25 = sbr.rel (0) target = $region29
  $region28: #{encoder_forward.1} parent=0 // pred_region
    _
  $region29: #{encoder_forward.1} parent=0 // pred_fallthru
    _
  %v26 = vld [vmem:[%s0] sm:$0xff]
  %v27 = vld [vmem:[%s0 + $0x8] sm:$0xff]
  %v28 = vld [vmem:[%s1] sm:$0xff]
  %v29 = vld [vmem:[%s1 + $0x8] sm:$0xff]
  %v30 = vld [vmem:[%s1 + $0x10] sm:$0xff]
  %v31 = vld [vmem:[%s1 + $0x18] sm:$0xff]
  %v32 = vld [vmem:[%s2] sm:$0x1]
  %v34 = vperm.slane %v32, 0
  %vm36 = vcmask 261120
  %v38 = vsel %vm36, %v26, 0
  %v41 = vsel %vm36, %v27, 0
  %43 = vmatpush.msra.mxu0 0.0
  %44 = vmatpush.msra.mxu0 0.0
  %45 = vmatpush.msra.mxu0 0.0
  %46 = vmatpush.msra.mxu0 0.0
  %47 = vmatpush.msra.mxu0 0.0
  %48 = vmatpush.msra.mxu0 0.0
  %49 = vmatpush.msra.mxu0 0.0
  %50 = vmatpush.msra.mxu0 0.0
  %51 = vmatpush.msra.mxu0 0.0
  %52 = vmatpush.msra.mxu0 0.0
  %53 = vmatpush.msra.mxu0 0.0
  %54 = vmatpush.msra.mxu0 0.0
  %55 = vmatpush.msra.mxu0 %v31
  %56 = vmatpush.msra.mxu0 %v30
  %57 = vmatpush.msra.mxu0 %v29
  %58 = vmatpush.msra.mxu0 %v28
  %59 = vmatmul.f32.gmra.mxu0 %v38
  %v60 = vpop.f32.mrf.mxu0
  %v61 = vadd.f32 %v34, %v60
  %62 = vmatmul.f32.gmra.mxu0 %v41
  %v63 = vpop.f32.mrf.mxu0
  %v64 = vadd.f32 %v34, %v63
  %65 = vdwg.mxu0
  %v66 = vmax.f32 %v61, 0.0
  %v67 = vmax.f32 %v64, 0.0
  %v68 = vld [vmem:[%s3] sm:$0xff]
  %v69 = vld [vmem:[%s3 + $0x8] sm:$0xff]
  %v70 = vld [vmem:[%s3 + $0x10] sm:$0xff]
  %v71 = vld [vmem:[%s3 + $0x18] sm:$0xff]
  %v72 = vld [vmem:[%s4] sm:$0x1]
  %v74 = vperm.slane %v72, 0
  %v77 = vsel %vm36, %v66, 0
  %v80 = vsel %vm36, %v67, 0
  %82 = vmatpush.msra.mxu0 0.0
  %83 = vmatpush.msra.mxu0 0.0
  %84 = vmatpush.msra.mxu0 0.0
  %85 = vmatpush.msra.mxu0 0.0
  %86 = vmatpush.msra.mxu0 0.0
  %87 = vmatpush.msra.mxu0 0.0
  %88 = vmatpush.msra.mxu0 0.0
  %89 = vmatpush.msra.mxu0 0.0
  %90 = vmatpush.msra.mxu0 0.0
  %91 = vmatpush.msra.mxu0 0.0
  %92 = vmatpush.msra.mxu0 0.0
  %93 = vmatpush.msra.mxu0 0.0
  %94 = vmatpush.msra.mxu0 %v71
  %95 = vmatpush.msra.mxu0 %v70
  %96 = vmatpush.msra.mxu0 %v69
  %97 = vmatpush.msra.mxu0 %v68
  %98 = vmatmul.f32.gmra.mxu0 %v77
  %v99 = vpop.f32.mrf.mxu0
  %v100 = vadd.f32 %v74, %v99
  %101 = vmatmul.f32.gmra.mxu0 %v80
  %v102 = vpop.f32.mrf.mxu0
  %v103 = vadd.f32 %v74, %v102
  %104 = vdwg.mxu0
  %v105 = vmax.f32 %v100, 0.0
  %v106 = vmax.f32 %v103, 0.0
  %v107 = vld [vmem:[%s5] sm:$0xff]
  %v108 = vld [vmem:[%s5 + $0x8] sm:$0xff]
  %v109 = vld [vmem:[%s5 + $0x10] sm:$0xff]
  %v110 = vld [vmem:[%s5 + $0x18] sm:$0xff]
  %v111 = vld [vmem:[%s6] sm:$0x1]
  %v113 = vperm.slane %v111, 0
  %v116 = vsel %vm36, %v105, 0
  %v119 = vsel %vm36, %v106, 0
  %121 = vmatpush.msra.mxu0 0.0
  %122 = vmatpush.msra.mxu0 0.0
  %123 = vmatpush.msra.mxu0 0.0
  %124 = vmatpush.msra.mxu0 0.0
  %125 = vmatpush.msra.mxu0 0.0
  %126 = vmatpush.msra.mxu0 0.0
  %127 = vmatpush.msra.mxu0 0.0
  %128 = vmatpush.msra.mxu0 0.0
  %129 = vmatpush.msra.mxu0 0.0
  %130 = vmatpush.msra.mxu0 0.0
  %131 = vmatpush.msra.mxu0 0.0
  %132 = vmatpush.msra.mxu0 0.0
  %133 = vmatpush.msra.mxu0 %v110
  %134 = vmatpush.msra.mxu0 %v109
  %135 = vmatpush.msra.mxu0 %v108
  %136 = vmatpush.msra.mxu0 %v107
  %137 = vmatmul.f32.gmra.mxu0 %v116
  %v138 = vpop.f32.mrf.mxu0
  %v139 = vadd.f32 %v113, %v138
  %140 = vmatmul.f32.gmra.mxu0 %v119
  %v141 = vpop.f32.mrf.mxu0
  %v142 = vadd.f32 %v113, %v141
  %143 = vdwg.mxu0
  %144 = vst.msk [vmem:[%s7] sm:$0xff] %vm36, %v139
  %145 = vst.msk [vmem:[%s7 + $0x8] sm:$0xff] %vm36, %v142
  // Predicated region
  $region30: #{encoder_forward.1} parent=0 // pred_check
    _
  $region31: #{encoder_forward.1} parent=0 // pred_check_branch
    %147 = sbr.rel (0) target = $region33
  $region32: #{encoder_forward.1} parent=0 // pred_region
    _
  $region33: #{encoder_forward.1} parent=0 // pred_fallthru
    _
  // Predicated region
  $region34: #{encoder_forward.1} parent=0 // pred_check
    _
  $region35: #{encoder_forward.1} parent=0 // pred_check_branch
    %149 = sbr.rel (0) target = $region37
  $region36: #{encoder_forward.1} parent=0 // pred_region
    _
  $region37: #{encoder_forward.1} parent=0 // pred_fallthru
    _

</llo_original>
